<compile_context>
chip_gen: v6e
topology: v6e:2x2x1
jax: 0.10.0
libtpu: 0.0.40
codegen_flags: <defaults>
</compile_context>

<pallas_src>
import functools

import jax
import jax.numpy as jnp
from jax.experimental import pallas as pl
from jax.experimental.pallas import tpu as pltpu


def _retrieval_sim_kernel(xn_ref, db_ref, sim_ref):
    """Similarity of pre-normalized queries against one DB tile.

    xn_ref : (B, D)   normalized query block (resident across the grid), bf16
    db_ref : (TN, D)  one tile of database embeddings, bf16
    sim_ref: (B, TN)  similarity tile, f32
    """
    # Contract on dim 1 of both operands: (B, D) x (TN, D) -> (B, TN).
    # Expressed directly so Mosaic feeds the MXU with a transposed RHS
    # instead of materializing an XLU transpose per step.
    sim_ref[...] = jax.lax.dot_general(
        xn_ref[...],
        db_ref[...],
        dimension_numbers=(((1,), (1,)), ((), ())),
        preferred_element_type=jnp.float32,
    )


def _retrieval_similarity(images_z: jax.Array, db_z: jax.Array, *, tile_n: int):
    """Cosine-style similarity of normalized queries vs. DB embeddings (B, N)."""
    B, D = images_z.shape
    N, D2 = db_z.shape
    assert D == D2

    # Hoisted L2 normalization (once, not once per DB tile). rsqrt -> EUP.
    x = images_z.astype(jnp.float32)
    inv_norm = jax.lax.rsqrt(jnp.sum(x * x, axis=-1, keepdims=True))
    xn = (x * inv_norm).astype(db_z.dtype)

    # Ragged last tile: pad the DB rows up to a multiple of tile_n.
    n_tiles = pl.cdiv(N, tile_n)
    n_pad = n_tiles * tile_n
    db = db_z if n_pad == N else jnp.pad(db_z, ((0, n_pad - N), (0, 0)))

    db_bytes = db.dtype.itemsize
    cost = pl.CostEstimate(
        flops=2 * B * n_pad * D,
        transcendentals=0,
        bytes_accessed=n_pad * D * db_bytes + B * D * db_bytes + B * n_pad * 4,
    )

    sim = pl.pallas_call(
        _retrieval_sim_kernel,
        out_shape=jax.ShapeDtypeStruct((B, n_pad), jnp.float32),
        grid_spec=pltpu.PrefetchScalarGridSpec(
            num_scalar_prefetch=0,
            grid=(n_tiles,),
            in_specs=[
                pl.BlockSpec((B, D), lambda j: (0, 0)),       # queries (resident)
                pl.BlockSpec((tile_n, D), lambda j: (j, 0)),  # DB tile
            ],
            out_specs=pl.BlockSpec((B, tile_n), lambda j: (0, j)),
        ),
        compiler_params=pltpu.CompilerParams(
            dimension_semantics=("parallel",),  # DB-tile axis splits across TCs on v7x
        ),
        cost_estimate=cost,
    )(xn, db)

    # Drop padded DB rows so they can never appear in top-k.
    return sim[:, :N]


@functools.partial(jax.jit, static_argnames=("tile_n",))
def retrieval_similarity(images_z: jax.Array, db_z: jax.Array, *, tile_n: int = 512):
    return _retrieval_similarity(images_z, db_z, tile_n=tile_n)


@functools.partial(jax.jit, static_argnames=("num_samples", "tile_n"))
def retrieval_topk(images_z: jax.Array, db_z: jax.Array, *, num_samples: int,
                   tile_n: int = 512):
    """Fused pipeline: normalize -> Pallas similarity -> top-k indices."""
    sim = _retrieval_similarity(images_z, db_z, tile_n=tile_n)
    # TODO(synk): for million-entry DBs, fuse a running top-k into the kernel
    # over the N grid axis instead of materializing the full (B, N) sim matrix.
    _, idx = jax.lax.top_k(sim, num_samples)
    return idx


class RetrievalVocabularyJAX:
    """JAX/Pallas re-implementation of RetrievalVocabulary's forward pass.

    The external RetrievalDatabase is replaced by a deterministic synthetic
    database: an (N, D) embedding matrix plus synthetic caption strings.
    """

    def __init__(self, num_db_entries: int = 2048, dim: int = 128, num_samples: int = 10):
        self.num_samples = num_samples
        key = jax.random.PRNGKey(42)
        db = jax.random.normal(key, (num_db_entries, dim), dtype=jnp.float32)
        # Stream the DB in bf16 (memory-bandwidth-bound); accumulate in f32.
        self.db_z = db.astype(jnp.bfloat16)
        # TODO(synk): real module loads captions from an external JSON/database;
        # here we synthesize deterministic caption strings.
        self.captions = [f"caption_{i:04d}" for i in range(num_db_entries)]

    def __call__(self, images_z: jax.Array) -> list[list[str]]:
        # forward(): normalize + database query (similarity + top-k), single jit,
        # no mid-pipeline host sync; only the small idx array comes back to host.
        idx = retrieval_topk(images_z, self.db_z, num_samples=self.num_samples)
        idx = jax.device_get(idx)                                # (B, num_samples)
        # __call__(): truncate to num_samples and map indices to caption strings.
        return [[self.captions[int(i)] for i in row][: self.num_samples]
                for row in idx]


if __name__ == "__main__":
    B, D, N = 8, 128, 2048   # batch of image embeddings, embed dim, DB size
    key = jax.random.PRNGKey(0)
    images_z = jax.random.normal(key, (B, D), dtype=jnp.float32)

    vocab = RetrievalVocabularyJAX(num_db_entries=N, dim=D, num_samples=10)

    # Run the Pallas kernel once and block on the result.
    sim = retrieval_similarity(images_z, vocab.db_z)
    sim = jax.block_until_ready(sim)

    # Reference check (account for the bf16 DB/query streaming).
    xn = images_z / jnp.linalg.norm(images_z, axis=-1, keepdims=True)
    xn_b = xn.astype(jnp.bfloat16).astype(jnp.float32)
    db_f = vocab.db_z.astype(jnp.float32)
    ref = xn_b @ db_f.T
    assert jnp.allclose(sim, ref, atol=2e-2, rtol=2e-2), "mismatch vs reference"

    # Ragged (non-multiple-of-tile_n) DB path check.
    N_ragged = 1920
    sim_r = jax.block_until_ready(retrieval_similarity(images_z, vocab.db_z[:N_ragged]))
    assert sim_r.shape == (B, N_ragged)
    assert jnp.allclose(sim_r, ref[:, :N_ragged], atol=2e-2, rtol=2e-2), "ragged mismatch"

    # Full forward semantics: list[list[str]] of top-num_samples captions.
    result = vocab(images_z)
    assert len(result) == B and all(len(r) == vocab.num_samples for r in result)

    print("KERNEL_OK")
</pallas_src>

<mosaic_0001>
module attributes {stable_mosaic.version = 11 : i64} {
  func.func @_retrieval_sim_kernel(%arg0: i32, %arg1: memref<8x128xbf16, #tpu.memory_space<vmem>>, %arg2: memref<512x128xbf16, #tpu.memory_space<vmem>>, %arg3: memref<8x512xf32, #tpu.memory_space<vmem>>) attributes {dimension_semantics = [#tpu.dimension_semantics<parallel>], iteration_bounds = array<i64: 4>, scalar_prefetch = 0 : i64, scratch_operands = 0 : i64, tpu.core_type = #tpu.core_type<tc>, window_params = [{pipeline_mode = #tpu.pipeline_mode<synchronous>, transform_indices = @transform_0, window_bounds = array<i64: 8, 128>}, {transform_indices = @transform_1, window_bounds = array<i64: 512, 128>}, {transform_indices = @transform_2, window_bounds = array<i64: 8, 512>}]} {
    %c0 = arith.constant 0 : index
    %c0_0 = arith.constant 0 : index
    %0 = vector.load %arg1[%c0, %c0_0] : memref<8x128xbf16, #tpu.memory_space<vmem>>, vector<8x128xbf16>
    %c0_1 = arith.constant 0 : index
    %c0_2 = arith.constant 0 : index
    %1 = vector.load %arg2[%c0_1, %c0_2] : memref<512x128xbf16, #tpu.memory_space<vmem>>, vector<512x128xbf16>
    %cst = arith.constant dense<0.000000e+00> : vector<8x512xf32>
    %2 = tpu.matmul %0, %1, %cst {dimension_numbers = #tpu.dot_dimension_numbers<[1], [1], [0], [0], [0, 0, 1, 0], [], []>} : vector<8x128xbf16>, vector<512x128xbf16>, vector<8x512xf32> -> vector<8x512xf32>
    %c0_3 = arith.constant 0 : index
    %c0_4 = arith.constant 0 : index
    %3 = vector.load %arg3[%c0_3, %c0_4] : memref<8x512xf32, #tpu.memory_space<vmem>>, vector<8x512xf32>
    tpu.vector_store %arg3[%c0_3, %c0_4], %2 {strides = array<i32>} : memref<8x512xf32, #tpu.memory_space<vmem>>, vector<8x512xf32>,
    return
  }
  func.func @transform_0(%arg0: i32) -> (i32, i32) {
    %c0_i32 = arith.constant 0 : i32
    %c0_i32_0 = arith.constant 0 : i32
    %c0_i32_1 = arith.constant 0 : i32
    return %c0_i32, %c0_i32_0 : i32, i32
  }
  func.func @transform_1(%arg0: i32) -> (i32, i32) {
    %c0_i32 = arith.constant 0 : i32
    %c0_i32_0 = arith.constant 0 : i32
    return %arg0, %c0_i32 : i32, i32
  }
  func.func @transform_2(%arg0: i32) -> (i32, i32) {
    %c0_i32 = arith.constant 0 : i32
    %c0_i32_0 = arith.constant 0 : i32
    return %c0_i32, %arg0 : i32, i32
  }
}

</mosaic_0001>

<llo_original>
// kernel: retrieval_similarity.1
$region0: #{retrieval_similarity.1}
  #allocation0 [shape = 'u32[]', space=smem, size = 0x4, offset = 0x4, fixed_abs, tag = 'smem constant byte address 0x4 - core index']
  #allocation1 [shape = 'u32[144,128]{1,0:T(1,128)}', space=vmem, size = 0x12000, scoped, tag = 'internal scratch']
  %s0 = inlined_call_operand.vmem [shape: bf16[8,128], index: 0, kind: input, shape index: {}]
  %s1 = inlined_call_operand.hbm [shape: bf16[2048,128], index: 1, kind: input, shape index: {}]
  %s2 = inlined_call_operand.hbm [shape: f32[8,2048], index: 2, kind: output, shape index: {}]
  %s3 = sld [smem:[#allocation0]]
  $region45: #{retrieval_similarity.1} parent=0
    _
  %s5 = ssub.s32 1, %s3
  %s6 = scalar_select 0, %s5, %s3
  $region1: #{retrieval_similarity.1} parent=0
    #allocation2 [shape = 'u8[262144]{0}', space=vmem, size = 0x40000, scoped, tag = 'input window, operand 1']
    #allocation3 [shape = 's32[2]{0}', space=sflag, size = 0x8, scoped, tag = 'scoped memory for retrieval_similarity.1']
    #allocation4 [shape = 's32[2]{0}', space=sflag, size = 0x8, scoped, tag = 'scoped memory for retrieval_similarity.1']
    #allocation5 [shape = 'u8[32768]{0}', space=vmem, size = 0x8000, scoped, tag = 'output window, operand 0']
    %7 = vsyncpa [#allocation3], 0
    %s8 = scalar_lea.sflag [#allocation3], 1
    %9 = vsyncpa %s8, 0
    %10 = vsyncpa [#allocation4], 0
    %s11 = scalar_lea.sflag [#allocation4], 1
    %12 = vsyncpa %s11, 0
    loop: start=0, step=1, limit=6
    $region2: #{retrieval_similarity.1} parent=1 // loop_pre_header
      _
    $region3: #{retrieval_similarity.1} parent=1 // loop_header
      %s14 = sphi 0, %s18
      %p15 = scmp.ge.s32.totalorder %s14, 6
      %s22 = sphi 0, %s22
      %s24 = sphi 0, %s22
      %s25 = sphi 0, %s24
      %s39 = sphi 0, %s25
      %s45 = sphi 0, %s47
      %s48 = sphi 0, %s45
      %s49 = sphi 0, %s48
      %s65 = sphi 0, %s49
      %s71 = sphi 0, %s73
      %s74 = sphi 0, %s71
      %s75 = sphi 0, %s74
      %s91 = sphi 0, %s75
    $region4: #{retrieval_similarity.1} parent=1 // loop_header_branch
      %17 = sbr.rel (%p15) target = $region8
    $region5: #{retrieval_similarity.1} parent=1 // loop_body
      %s19 = ssub.s32 %s14, 1
      %s20 = ssub.s32 %s14, 2
      %s21 = sadd.s32 %s14, 1
      %s23 = sadd.s32 %s22, 1
      %p26 = scmp.eq.s32.totalorder %s14, 3
      %p27 = scmp.ne.s32.totalorder %s22, %s24
      %p28 = scmp.eq.s32.totalorder %s14, 0
      %p29 = por %p27, %p28
      %p30 = scmp.ne.s32.totalorder %s22, %s24
      %p31 = scmp.eq.s32.totalorder %s19, 3
      %p32 = por %p30, %p31
      %p33 = scmp.ne.s32.totalorder %s24, %s25
      %p34 = scmp.eq.s32.totalorder %s19, 0
      %p35 = por %p33, %p34
      %p36 = scmp.ne.s32.totalorder %s24, %s25
      %p37 = scmp.eq.s32.totalorder %s20, 3
      %p38 = por %p36, %p37
      %p40 = scmp.ne.s32.totalorder %s25, %s39
      %p41 = scmp.eq.s32.totalorder %s20, 0
      %p42 = por %p40, %p41
      %s43 = ssub.s32 %s14, %s21
      %p44 = scmp.eq.s32.totalorder %s43, 0
      %s46 = sadd.s32 %s45, 1
      %s47 = scalar_select %p44, %s45, %s46
      %p50 = pneg %p44
      %p51 = scmp.eq.s32.totalorder %s14, 3
      %p52 = por %p50, %p51
      %p53 = scmp.ne.s32.totalorder %s45, %s48
      %p54 = scmp.eq.s32.totalorder %s14, 0
      %p55 = por %p53, %p54
      %p56 = scmp.ne.s32.totalorder %s45, %s48
      %p57 = scmp.eq.s32.totalorder %s19, 3
      %p58 = por %p56, %p57
      %p59 = scmp.ne.s32.totalorder %s48, %s49
      %p60 = scmp.eq.s32.totalorder %s19, 0
      %p61 = por %p59, %p60
      %p62 = scmp.ne.s32.totalorder %s48, %s49
      %p63 = scmp.eq.s32.totalorder %s20, 3
      %p64 = por %p62, %p63
      %p66 = scmp.ne.s32.totalorder %s49, %s65
      %p67 = scmp.eq.s32.totalorder %s20, 0
      %p68 = por %p66, %p67
      %s69 = ssub.s32 %s14, %s21
      %p70 = scmp.eq.s32.totalorder %s69, 0
      %s72 = sadd.s32 %s71, 1
      %s73 = scalar_select %p70, %s71, %s72
      %p76 = pneg %p70
      %p77 = scmp.eq.s32.totalorder %s14, 3
      %p78 = por %p76, %p77
      %p79 = scmp.ne.s32.totalorder %s71, %s74
      %p80 = scmp.eq.s32.totalorder %s14, 0
      %p81 = por %p79, %p80
      %p82 = scmp.ne.s32.totalorder %s71, %s74
      %p83 = scmp.eq.s32.totalorder %s19, 3
      %p84 = por %p82, %p83
      %p85 = scmp.ne.s32.totalorder %s74, %s75
      %p86 = scmp.eq.s32.totalorder %s19, 0
      %p87 = por %p85, %p86
      %p88 = scmp.ne.s32.totalorder %s74, %s75
      %p89 = scmp.eq.s32.totalorder %s20, 3
      %p90 = por %p88, %p89
      %p92 = scmp.ne.s32.totalorder %s75, %s91
      %p93 = scmp.eq.s32.totalorder %s20, 0
      %p94 = por %p92, %p93
      %p95 = scmp.le.s32.totalorder 1, %s14
      %p96 = scmp.lt.s32.totalorder %s14, 5
      %p97 = pnand %p95, %p96
      %p98 = pneg %p97
      // Predicated region
      $region9: #{retrieval_similarity.1} parent=5 // pred_check
        _
      $region10: #{retrieval_similarity.1} parent=5 // pred_check_branch
        %100 = sbr.rel (%p97) target = $region12
      $region11: #{retrieval_similarity.1} parent=5 // pred_region
        %s101 = ssub.s32 %s14, 1
        // Predicated region
        $region13: #{retrieval_similarity.1} parent=11 // pred_check
          %p102 = pneg %p35
        $region14: #{retrieval_similarity.1} parent=11 // pred_check_branch
          %104 = sbr.rel (%p102) target = $region16
        $region15: #{retrieval_similarity.1} parent=11 // pred_region
          _
        $region16: #{retrieval_similarity.1} parent=11 // pred_fallthru
          _
      $region12: #{retrieval_similarity.1} parent=5 // pred_fallthru
        _
      %p105 = scmp.lt.s32.totalorder %s14, 4
      // Predicated region
      $region17: #{retrieval_similarity.1} parent=5 // pred_check
        %p106 = pneg %p105
      $region18: #{retrieval_similarity.1} parent=5 // pred_check_branch
        %108 = sbr.rel (%p106) target = $region20
      $region19: #{retrieval_similarity.1} parent=5 // pred_region
        // Predicated region
        $region21: #{retrieval_similarity.1} parent=19 // pred_check
          %p109 = pneg %p55
        $region22: #{retrieval_similarity.1} parent=19 // pred_check_branch
          %111 = sbr.rel (%p109) target = $region24
        $region23: #{retrieval_similarity.1} parent=19 // pred_region
          %s112 = sand.u32 %s45, 1
          %s113 = scalar_lea.sflag [#allocation3], %s112
          %s114 = sand.u32 %s45, 1
          %s115 = smul.addr %s114, 256
          %s116 = scalar_lea.vmem [#allocation2], %s115
          %s117 = smul.u32 64, %s14
          %s119 = ssub.s32 4096, 4096
          %120 = vsyncadd %s113, %s119
          %s121 = smul.addr %s117, 64
          %s122 = scalar_lea.hbm %s1, %s121
          %s123 = sshll.u32 %s116, 4
          %s124 = int_to_ptr.vmem [resolvable:$true] %s123
          %129 = dma.hbm_to_vmem [thread:$0]  %s122, 4096, %s124, %s113, 64, 64, 4
        $region24: #{retrieval_similarity.1} parent=19 // pred_fallthru
          _
      $region20: #{retrieval_similarity.1} parent=5 // pred_fallthru
        _
      %p130 = scmp.le.s32.totalorder 1, %s14
      %p131 = scmp.lt.s32.totalorder %s14, 5
      %p132 = pnand %p130, %p131
      %p133 = pneg %p132
      // Predicated region
      $region25: #{retrieval_similarity.1} parent=5 // pred_check
        _
      $region26: #{retrieval_similarity.1} parent=5 // pred_check_branch
        %135 = sbr.rel (%p132) target = $region28
      $region27: #{retrieval_similarity.1} parent=5 // pred_region
        %s136 = ssub.s32 %s14, 1
        %s137 = sand.u32 %s48, 1
        %s138 = scalar_lea.sflag [#allocation3], %s137
        %s139 = sand.u32 %s48, 1
        %s140 = smul.addr %s139, 256
        %s141 = scalar_lea.vmem [#allocation2], %s140
        // Predicated region
        $region29: #{retrieval_similarity.1} parent=27 // pred_check
          %p142 = pneg %p61
        $region30: #{retrieval_similarity.1} parent=27 // pred_check_branch
          %144 = sbr.rel (%p142) target = $region32
        $region31: #{retrieval_similarity.1} parent=27 // pred_region
          %145 = dma.done %s138, 4096
        $region32: #{retrieval_similarity.1} parent=27 // pred_fallthru
          _
        %p146 = pneg %p35
        %p147 = pneg %p32
        %s148 = sand.u32 %s48, 1
        %s149 = scalar_lea.sflag [#allocation3], %s148
        %s150 = sand.u32 %s48, 1
        %s151 = smul.addr %s150, 256
        %s152 = scalar_lea.vmem [#allocation2], %s151
        %p153 = pneg %p61
        %p154 = pneg %p58
        %p155 = pneg %p87
        %p156 = pneg %p84
        %s157 = sand.u32 %s74, 1
        %s158 = scalar_lea.sflag [#allocation4], %s157
        %s159 = sand.u32 %s74, 1
        %s160 = smul.addr %s159, 32
        %s161 = scalar_lea.vmem [#allocation5], %s160
        %s162 = smul.u32 64, %s19
        %s163 = smul.u32 4, %s19
        %v165 = vld [vmem:[%s0] sm:$0xf]
        %v166 = vld [vmem:[%s141] sm:$0xf]
        %v167 = vld [vmem:[%s141 + $0x4] sm:$0xf]
        %v168 = vld [vmem:[%s141 + $0x8] sm:$0xf]
        %v169 = vld [vmem:[%s141 + $0xc] sm:$0xf]
        %v170 = vld [vmem:[%s141 + $0x10] sm:$0xf]
        %v171 = vld [vmem:[%s141 + $0x14] sm:$0xf]
        %v172 = vld [vmem:[%s141 + $0x18] sm:$0xf]
        %v173 = vld [vmem:[%s141 + $0x1c] sm:$0xf]
        %v174 = vld [vmem:[%s141 + $0x20] sm:$0xf]
        %v175 = vld [vmem:[%s141 + $0x24] sm:$0xf]
        %v176 = vld [vmem:[%s141 + $0x28] sm:$0xf]
        %v177 = vld [vmem:[%s141 + $0x2c] sm:$0xf]
        %v178 = vld [vmem:[%s141 + $0x30] sm:$0xf]
        %v179 = vld [vmem:[%s141 + $0x34] sm:$0xf]
        %v180 = vld [vmem:[%s141 + $0x38] sm:$0xf]
        %v181 = vld [vmem:[%s141 + $0x3c] sm:$0xf]
        %v182 = vld [vmem:[%s141 + $0x40] sm:$0xf]
        %v183 = vld [vmem:[%s141 + $0x44] sm:$0xf]
        %v184 = vld [vmem:[%s141 + $0x48] sm:$0xf]
        %v185 = vld [vmem:[%s141 + $0x4c] sm:$0xf]
        %v186 = vld [vmem:[%s141 + $0x50] sm:$0xf]
        %v187 = vld [vmem:[%s141 + $0x54] sm:$0xf]
        %v188 = vld [vmem:[%s141 + $0x58] sm:$0xf]
        %v189 = vld [vmem:[%s141 + $0x5c] sm:$0xf]
        %v190 = vld [vmem:[%s141 + $0x60] sm:$0xf]
        %v191 = vld [vmem:[%s141 + $0x64] sm:$0xf]
        %v192 = vld [vmem:[%s141 + $0x68] sm:$0xf]
        %v193 = vld [vmem:[%s141 + $0x6c] sm:$0xf]
        %v194 = vld [vmem:[%s141 + $0x70] sm:$0xf]
        %v195 = vld [vmem:[%s141 + $0x74] sm:$0xf]
        %v196 = vld [vmem:[%s141 + $0x78] sm:$0xf]
        %v197 = vld [vmem:[%s141 + $0x7c] sm:$0xf]
        %v198 = vld [vmem:[%s141 + $0x80] sm:$0xf]
        %v199 = vld [vmem:[%s141 + $0x84] sm:$0xf]
        %v200 = vld [vmem:[%s141 + $0x88] sm:$0xf]
        %v201 = vld [vmem:[%s141 + $0x8c] sm:$0xf]
        %v202 = vld [vmem:[%s141 + $0x90] sm:$0xf]
        %v203 = vld [vmem:[%s141 + $0x94] sm:$0xf]
        %v204 = vld [vmem:[%s141 + $0x98] sm:$0xf]
        %v205 = vld [vmem:[%s141 + $0x9c] sm:$0xf]
        %v206 = vld [vmem:[%s141 + $0xa0] sm:$0xf]
        %v207 = vld [vmem:[%s141 + $0xa4] sm:$0xf]
        %v208 = vld [vmem:[%s141 + $0xa8] sm:$0xf]
        %v209 = vld [vmem:[%s141 + $0xac] sm:$0xf]
        %v210 = vld [vmem:[%s141 + $0xb0] sm:$0xf]
        %v211 = vld [vmem:[%s141 + $0xb4] sm:$0xf]
        %v212 = vld [vmem:[%s141 + $0xb8] sm:$0xf]
        %v213 = vld [vmem:[%s141 + $0xbc] sm:$0xf]
        %v214 = vld [vmem:[%s141 + $0xc0] sm:$0xf]
        %v215 = vld [vmem:[%s141 + $0xc4] sm:$0xf]
        %v216 = vld [vmem:[%s141 + $0xc8] sm:$0xf]
        %v217 = vld [vmem:[%s141 + $0xcc] sm:$0xf]
        %v218 = vld [vmem:[%s141 + $0xd0] sm:$0xf]
        %v219 = vld [vmem:[%s141 + $0xd4] sm:$0xf]
        %v220 = vld [vmem:[%s141 + $0xd8] sm:$0xf]
        %v221 = vld [vmem:[%s141 + $0xdc] sm:$0xf]
        %v222 = vld [vmem:[%s141 + $0xe0] sm:$0xf]
        %v223 = vld [vmem:[%s141 + $0xe4] sm:$0xf]
        %v224 = vld [vmem:[%s141 + $0xe8] sm:$0xf]
        %v225 = vld [vmem:[%s141 + $0xec] sm:$0xf]
        %v226 = vld [vmem:[%s141 + $0xf0] sm:$0xf]
        %v227 = vld [vmem:[%s141 + $0xf4] sm:$0xf]
        %v228 = vld [vmem:[%s141 + $0xf8] sm:$0xf]
        %v229 = vld [vmem:[%s141 + $0xfc] sm:$0xf]
        %v294 = vunpack.c.l.b16 %v166
        %v295 = vunpack.c.l.b16 %v167
        %v296 = vunpack.c.l.b16 %v168
        %v297 = vunpack.c.l.b16 %v169
        %v298 = vunpack.c.l.b16 %v170
        %v299 = vunpack.c.l.b16 %v171
        %v300 = vunpack.c.l.b16 %v172
        %v301 = vunpack.c.l.b16 %v173
        %v302 = vunpack.c.l.b16 %v174
        %v303 = vunpack.c.l.b16 %v175
        %v304 = vunpack.c.l.b16 %v176
        %v305 = vunpack.c.l.b16 %v177
        %v306 = vunpack.c.l.b16 %v178
        %v307 = vunpack.c.l.b16 %v179
        %v308 = vunpack.c.l.b16 %v180
        %v309 = vunpack.c.l.b16 %v181
        %v310 = vunpack.c.l.b16 %v182
        %v311 = vunpack.c.l.b16 %v183
        %v312 = vunpack.c.l.b16 %v184
        %v313 = vunpack.c.l.b16 %v185
        %v314 = vunpack.c.l.b16 %v186
        %v315 = vunpack.c.l.b16 %v187
        %v316 = vunpack.c.l.b16 %v188
        %v317 = vunpack.c.l.b16 %v189
        %v318 = vunpack.c.l.b16 %v190
        %v319 = vunpack.c.l.b16 %v191
        %v320 = vunpack.c.l.b16 %v192
        %v321 = vunpack.c.l.b16 %v193
        %v322 = vunpack.c.l.b16 %v194
        %v323 = vunpack.c.l.b16 %v195
        %v324 = vunpack.c.l.b16 %v196
        %v325 = vunpack.c.l.b16 %v197
        %v326 = vunpack.c.l.b16 %v198
        %v327 = vunpack.c.l.b16 %v199
        %v328 = vunpack.c.l.b16 %v200
        %v329 = vunpack.c.l.b16 %v201
        %v330 = vunpack.c.l.b16 %v202
        %v331 = vunpack.c.l.b16 %v203
        %v332 = vunpack.c.l.b16 %v204
        %v333 = vunpack.c.l.b16 %v205
        %v334 = vunpack.c.l.b16 %v206
        %v335 = vunpack.c.l.b16 %v207
        %v336 = vunpack.c.l.b16 %v208
        %v337 = vunpack.c.l.b16 %v209
        %v338 = vunpack.c.l.b16 %v210
        %v339 = vunpack.c.l.b16 %v211
        %v340 = vunpack.c.l.b16 %v212
        %v341 = vunpack.c.l.b16 %v213
        %v342 = vunpack.c.l.b16 %v214
        %v343 = vunpack.c.l.b16 %v215
        %v344 = vunpack.c.l.b16 %v216
        %v345 = vunpack.c.l.b16 %v217
        %v346 = vunpack.c.l.b16 %v218
        %v347 = vunpack.c.l.b16 %v219
        %v348 = vunpack.c.l.b16 %v220
        %v349 = vunpack.c.l.b16 %v221
        %v350 = vunpack.c.l.b16 %v222
        %v351 = vunpack.c.l.b16 %v223
        %v352 = vunpack.c.l.b16 %v224
        %v353 = vunpack.c.l.b16 %v225
        %v354 = vunpack.c.l.b16 %v226
        %v355 = vunpack.c.l.b16 %v227
        %v356 = vunpack.c.l.b16 %v228
        %v357 = vunpack.c.l.b16 %v229
        %v358 = vpack.c.b16 %v295, %v294
        %v359 = vpack.c.b16 %v297, %v296
        %v360 = vpack.c.b16 %v299, %v298
        %v361 = vpack.c.b16 %v301, %v300
        %v362 = vpack.c.b16 %v303, %v302
        %v363 = vpack.c.b16 %v305, %v304
        %v364 = vpack.c.b16 %v307, %v306
        %v365 = vpack.c.b16 %v309, %v308
        %v366 = vpack.c.b16 %v311, %v310
        %v367 = vpack.c.b16 %v313, %v312
        %v368 = vpack.c.b16 %v315, %v314
        %v369 = vpack.c.b16 %v317, %v316
        %v370 = vpack.c.b16 %v319, %v318
        %v371 = vpack.c.b16 %v321, %v320
        %v372 = vpack.c.b16 %v323, %v322
        %v373 = vpack.c.b16 %v325, %v324
        %v374 = vpack.c.b16 %v327, %v326
        %v375 = vpack.c.b16 %v329, %v328
        %v376 = vpack.c.b16 %v331, %v330
        %v377 = vpack.c.b16 %v333, %v332
        %v378 = vpack.c.b16 %v335, %v334
        %v379 = vpack.c.b16 %v337, %v336
        %v380 = vpack.c.b16 %v339, %v338
        %v381 = vpack.c.b16 %v341, %v340
        %v382 = vpack.c.b16 %v343, %v342
        %v383 = vpack.c.b16 %v345, %v344
        %v384 = vpack.c.b16 %v347, %v346
        %v385 = vpack.c.b16 %v349, %v348
        %v386 = vpack.c.b16 %v351, %v350
        %v387 = vpack.c.b16 %v353, %v352
        %v388 = vpack.c.b16 %v355, %v354
        %v389 = vpack.c.b16 %v357, %v356
        %422 = vmatprep.subr.bf16.mxu0 0
        %423 = vmatpush1.bf16.xpose.msra.mxu0 %v365
        %424 = vmatprep.subr.bf16.mxu0 0
        %425 = vmatpush1.bf16.xpose.msra.mxu0 %v364
        %426 = vmatprep.subr.bf16.mxu0 0
        %427 = vmatpush1.bf16.xpose.msra.mxu0 %v363
        %428 = vmatprep.subr.bf16.mxu0 0
        %429 = vmatpush1.bf16.xpose.msra.mxu0 %v362
        %430 = vmatprep.subr.bf16.mxu0 0
        %431 = vmatpush1.bf16.xpose.msra.mxu0 %v361
        %432 = vmatprep.subr.bf16.mxu0 0
        %433 = vmatpush1.bf16.xpose.msra.mxu0 %v360
        %434 = vmatprep.subr.bf16.mxu0 0
        %435 = vmatpush1.bf16.xpose.msra.mxu0 %v359
        %436 = vmatprep.subr.bf16.mxu0 0
        %437 = vmatpush1.bf16.xpose.msra.mxu0 %v358
        %438 = vmatprep.subr.bf16.mxu0 0
        %439 = vmatpush2.bf16.xpose.msra.mxu0 %v373
        %440 = vmatprep.subr.bf16.mxu0 0
        %441 = vmatpush2.bf16.xpose.msra.mxu0 %v372
        %442 = vmatprep.subr.bf16.mxu0 0
        %443 = vmatpush2.bf16.xpose.msra.mxu0 %v371
        %444 = vmatprep.subr.bf16.mxu0 0
        %445 = vmatpush2.bf16.xpose.msra.mxu0 %v370
        %446 = vmatprep.subr.bf16.mxu0 0
        %447 = vmatpush2.bf16.xpose.msra.mxu0 %v369
        %448 = vmatprep.subr.bf16.mxu0 0
        %449 = vmatpush2.bf16.xpose.msra.mxu0 %v368
        %450 = vmatprep.subr.bf16.mxu0 0
        %451 = vmatpush2.bf16.xpose.msra.mxu0 %v367
        %452 = vmatprep.subr.bf16.mxu0 0
        %453 = vmatpush2.bf16.xpose.msra.mxu0 %v366
        %454 = vmatprep.mubr.bf16.mxu0 0
        %455 = vmatmul.mubr.bf16.gmra.mxu0 %v165
        %v456 = vpop.f32.mrf.mxu0
        %v457 = vadd.f32 0.0, %v456
        %v458 = vpop.f32.mrf.mxu0
        %v459 = vadd.f32 0.0, %v458
        %v460 = vpop.f32.mrf.mxu0
        %v461 = vpop.f32.mrf.mxu0
        %462 = vdwg.mxu0
        %463 = vmatprep.subr.bf16.mxu0 0
        %464 = vmatpush1.bf16.xpose.msra.mxu0 %v381
        %465 = vmatprep.subr.bf16.mxu0 0
        %466 = vmatpush1.bf16.xpose.msra.mxu0 %v380
        %467 = vmatprep.subr.bf16.mxu0 0
        %468 = vmatpush1.bf16.xpose.msra.mxu0 %v379
        %469 = vmatprep.subr.bf16.mxu0 0
        %470 = vmatpush1.bf16.xpose.msra.mxu0 %v378
        %471 = vmatprep.subr.bf16.mxu0 0
        %472 = vmatpush1.bf16.xpose.msra.mxu0 %v377
        %473 = vmatprep.subr.bf16.mxu0 0
        %474 = vmatpush1.bf16.xpose.msra.mxu0 %v376
        %475 = vmatprep.subr.bf16.mxu0 0
        %476 = vmatpush1.bf16.xpose.msra.mxu0 %v375
        %477 = vmatprep.subr.bf16.mxu0 0
        %478 = vmatpush1.bf16.xpose.msra.mxu0 %v374
        %479 = vmatprep.subr.bf16.mxu0 0
        %480 = vmatpush2.bf16.xpose.msra.mxu0 %v389
        %481 = vmatprep.subr.bf16.mxu0 0
        %482 = vmatpush2.bf16.xpose.msra.mxu0 %v388
        %483 = vmatprep.subr.bf16.mxu0 0
        %484 = vmatpush2.bf16.xpose.msra.mxu0 %v387
        %485 = vmatprep.subr.bf16.mxu0 0
        %486 = vmatpush2.bf16.xpose.msra.mxu0 %v386
        %487 = vmatprep.subr.bf16.mxu0 0
        %488 = vmatpush2.bf16.xpose.msra.mxu0 %v385
        %489 = vmatprep.subr.bf16.mxu0 0
        %490 = vmatpush2.bf16.xpose.msra.mxu0 %v384
        %491 = vmatprep.subr.bf16.mxu0 0
        %492 = vmatpush2.bf16.xpose.msra.mxu0 %v383
        %493 = vmatprep.subr.bf16.mxu0 0
        %494 = vmatpush2.bf16.xpose.msra.mxu0 %v382
        %495 = vmatprep.mubr.bf16.mxu0 0
        %496 = vmatmul.mubr.bf16.gmra.mxu0 %v165
        %v497 = vpop.f32.mrf.mxu0
        %v498 = vadd.f32 0.0, %v497
        %v499 = vpop.f32.mrf.mxu0
        %v500 = vadd.f32 0.0, %v499
        %v501 = vpop.f32.mrf.mxu0
        %v502 = vpop.f32.mrf.mxu0
        %503 = vdwg.mxu0
        %504 = vst [vmem:[%s161] sm:$0xff] %v457
        %505 = vst [vmem:[%s161 + $0x8] sm:$0xff] %v459
        %506 = vst [vmem:[%s161 + $0x10] sm:$0xff] %v498
        %507 = vst [vmem:[%s161 + $0x18] sm:$0xff] %v500
        %s508 = sand.u32 %s74, 1
        %s509 = scalar_lea.sflag [#allocation4], %s508
        %s510 = sand.u32 %s74, 1
        %s511 = smul.addr %s510, 32
        %s512 = scalar_lea.vmem [#allocation5], %s511
        // Predicated region
        $region33: #{retrieval_similarity.1} parent=27 // pred_check
          %p513 = pneg %p84
        $region34: #{retrieval_similarity.1} parent=27 // pred_check_branch
          %515 = sbr.rel (%p513) target = $region36
        $region35: #{retrieval_similarity.1} parent=27 // pred_region
          %s516 = smul.u32 4, %s19
          %s518 = ssub.s32 512, 512
          %519 = vsyncadd %s509, %s518
          %s520 = smul.addr %s516, 128
          %s521 = scalar_lea.hbm %s2, %s520
          %s523 = sshll.u32 %s512, 4
          %s524 = int_to_ptr.vmem [resolvable:$true] %s523
          %526 = dma.vmem_to_hbm [thread:$0]  %s524, 512, %s521, %s509
        $region36: #{retrieval_similarity.1} parent=27 // pred_fallthru
          _
      $region28: #{retrieval_similarity.1} parent=5 // pred_fallthru
        _
      %p527 = scmp.le.s32.totalorder 2, %s14
      // Predicated region
      $region37: #{retrieval_similarity.1} parent=5 // pred_check
        %p528 = pneg %p527
      $region38: #{retrieval_similarity.1} parent=5 // pred_check_branch
        %530 = sbr.rel (%p528) target = $region40
      $region39: #{retrieval_similarity.1} parent=5 // pred_region
        %s531 = ssub.s32 %s14, 2
        // Predicated region
        $region41: #{retrieval_similarity.1} parent=39 // pred_check
          %p532 = pneg %p90
        $region42: #{retrieval_similarity.1} parent=39 // pred_check_branch
          %534 = sbr.rel (%p532) target = $region44
        $region43: #{retrieval_similarity.1} parent=39 // pred_region
          %s535 = sand.u32 %s75, 1
          %s536 = scalar_lea.sflag [#allocation4], %s535
          %s537 = sand.u32 %s75, 1
          %s538 = smul.addr %s537, 32
          %s539 = scalar_lea.vmem [#allocation5], %s538
          %540 = dma.done %s536, 512
        $region44: #{retrieval_similarity.1} parent=39 // pred_fallthru
          _
      $region40: #{retrieval_similarity.1} parent=5 // pred_fallthru
        _
    $region6: #{retrieval_similarity.1} parent=1 // loop_footer
      %s18 = sadd.s32 1, %s14
    $region7: #{retrieval_similarity.1} parent=1 // loop_footer_branch
      %13 = sbr.rel target = $region3
    $region8: #{retrieval_similarity.1} parent=1 // loop_exit
      _
    %541 = vsyncpa [#allocation3], 1
    %s542 = scalar_lea.sflag [#allocation3], 1
    %543 = vsyncpa %s542, 1
    %544 = vsyncpa [#allocation4], 1
    %s545 = scalar_lea.sflag [#allocation4], 1
    %546 = vsyncpa %s545, 1

</llo_original>
